<compile_context>
chip_gen: v7x
topology: tpu7x:2x2x1
jax: 0.10.0
libtpu: 0.0.40
codegen_flags: <defaults>
</compile_context>

<pallas_src>
import math

import jax
import jax.numpy as jnp
from jax import lax
from jax.experimental import pallas as pl
from jax.experimental.pallas import tpu as pltpu

_TF_MAX = 4096   # reduction tile upper bound (multiple of 256)
_TB_MAX = 512    # batch tile upper bound (sized for v7x 64 MiB VMEM w/ f32 img)


def _round_up(x, m):
    return (x + m - 1) // m * m


def _pick_tf(F, tf_max=_TF_MAX):
    """Reduction tile: big (amortize ~0.35us/step), multiple of 256, and when
    possible a divisor of round_up(F,256) so the image needs no padding pass."""
    f256 = _round_up(F, 256)
    if f256 <= tf_max:
        return f256
    best = 0
    t = 256
    while t <= tf_max:
        if f256 % t == 0:
            best = t
        t += 256
    return best if best >= 1024 else tf_max


def _pick_tb(B):
    """Batch tile <= _TB_MAX chosen to minimize padded rows."""
    b8 = _round_up(max(B, 1), 8)
    n_tiles = -(-b8 // _TB_MAX)                  # ceil
    tb = _round_up(-(-b8 // n_tiles), 8)         # ceil(b8/n_tiles), 8-aligned
    return tb, _round_up(b8, tb)


def _simulacra_kernel(img_ref, wenc_ref, wlin_ref, blin_ref, out_ref, acc_ref):
    k = pl.program_id(1)

    @pl.when(k == 0)
    def _():
        acc_ref[...] = jnp.zeros_like(acc_ref)

    # Dominant work: (TB, TF) @ (TF, D) on the MXU, f32 accumulation.
    # Image tile arrives in f32 and is cast to bf16 on the VPU here (saves a
    # wrapper-side cast pass over the whole image array).
    acc_ref[...] += jnp.dot(img_ref[...].astype(jnp.bfloat16), wenc_ref[...],
                            preferred_element_type=jnp.float32)

    @pl.when(k == pl.num_programs(1) - 1)
    def _():
        enc = acc_ref[...]                                        # [TB, D] f32
        d = enc.shape[-1]
        # F.normalize(dim=-1): x / max(||x||_2, 1e-12) == x * rsqrt(max(|x|^2, 1e-24))
        sq = jnp.sum(enc * enc, axis=-1, keepdims=True)           # [TB, 1]
        inv_norm = lax.rsqrt(jnp.maximum(sq, 1e-24))              # EUP rsqrt
        # Linear probe D->1 as VPU mul + XLU lane reduce (no N=1 MXU matmul).
        proj = jnp.sum(enc * wlin_ref[...], axis=-1, keepdims=True)   # [TB, 1]
        score = proj * inv_norm * jnp.sqrt(jnp.float32(d)) + blin_ref[0, 0]
        # Lane-dense, unmasked writeback: broadcast the score across 128 lanes.
        out_ref[...] = jnp.broadcast_to(score, out_ref.shape).astype(out_ref.dtype)


def prepare_simulacra_params(w_enc, w_lin, b_lin, *, tf_max=_TF_MAX):
    """One-time weight preparation, hoisted out of the per-call hot path."""
    F, D = w_enc.shape
    assert D % 128 == 0, "embedding dim must be lane-aligned"
    TF = _pick_tf(F, tf_max)
    F_pad = _round_up(F, TF)
    w = w_enc.astype(jnp.bfloat16)
    if F_pad != F:
        w = jnp.pad(w, ((0, F_pad - F), (0, 0)))  # zero rows contribute nothing
    return {
        "w_enc_padded": w,                                     # [F_pad, D] bf16
        "w_lin_row": w_lin.reshape(1, D).astype(jnp.float32),  # lane-dense row
        "bias": jnp.asarray(b_lin, jnp.float32).reshape(1, 1),
        "F": F, "F_pad": F_pad, "D": D, "TF": TF,
    }


def simulacra_aesthetic(images, params):
    """images: [B, C, H, W].  Returns [B, 1] f32 aesthetic score."""
    w_enc_p = params["w_enc_padded"]
    w_lin_row = params["w_lin_row"]
    b_smem = params["bias"]
    F, F_pad, D, TF = params["F"], params["F_pad"], params["D"], params["TF"]

    B = images.shape[0]
    assert math.prod(images.shape[1:]) == F, "image feature size mismatch"
    TB, B_pad = _pick_tb(B)

    img = images.reshape(B, F)                    # free view; dtype untouched
    if B_pad != B or F_pad != F:
        # Only pays an extra pass when padding is actually required; for the
        # standard CLIP shapes (F % 256 == 0, TF | F) this is a no-op.
        img = jnp.pad(img, ((0, B_pad - B), (0, F_pad - F)))

    grid = (B_pad // TB, F_pad // TF)
    n_btiles = grid[0]
    itemsize = jnp.dtype(img.dtype).itemsize

    # VMEM footprint (double-buffered inputs, f32 accumulator) + headroom.
    vmem_need = (2 * TB * TF * itemsize        # image tiles
                 + 2 * TF * D * 2              # W_enc tiles (bf16)
                 + TB * D * 4                  # accumulator
                 + 2 * TB * 128 * 4            # output blocks
                 + 2 * D * 4)                  # w_lin row
    vmem_limit = min(max(vmem_need + (4 << 20), 32 << 20), 48 << 20)

    cost = pl.CostEstimate(
        flops=2 * B_pad * F_pad * D + 6 * B_pad * D,
        transcendentals=B_pad,
        bytes_accessed=(B_pad * F_pad * itemsize       # image, read once
                        + n_btiles * F_pad * D * 2     # W_enc re-streamed per batch tile
                        + n_btiles * D * 4             # w_lin row per batch tile
                        + B_pad * 128 * 4),            # output
    )

    out = pl.pallas_call(
        _simulacra_kernel,
        out_shape=jax.ShapeDtypeStruct((B_pad, 128), jnp.float32),
        grid_spec=pltpu.PrefetchScalarGridSpec(
            num_scalar_prefetch=0,
            grid=grid,
            in_specs=[
                pl.BlockSpec((TB, TF), lambda i, k: (i, k)),          # image tile (f32)
                pl.BlockSpec((TF, D), lambda i, k: (k, 0)),           # W_enc tile (bf16)
                pl.BlockSpec((1, D), lambda i, k: (0, 0)),            # w_lin row
                pl.BlockSpec(memory_space=pltpu.MemorySpace.SMEM),    # bias scalar
            ],
            out_specs=pl.BlockSpec((TB, 128), lambda i, k: (i, 0)),
            scratch_shapes=[pltpu.VMEM((TB, D), jnp.float32)],        # accumulator
        ),
        compiler_params=pltpu.CompilerParams(
            dimension_semantics=("parallel", "arbitrary"),
            vmem_limit_bytes=int(vmem_limit),
        ),
        cost_estimate=cost,
    )(img, w_enc_p, w_lin_row, b_smem)

    return out[:B, :1]


def _reference(images, w_enc, w_lin, b_lin):
    """Pure-JAX reference with the same bf16-matmul / f32-head numerics."""
    B = images.shape[0]
    x = images.reshape(B, -1).astype(jnp.bfloat16)
    enc = jnp.dot(x, w_enc.astype(jnp.bfloat16),
                  preferred_element_type=jnp.float32)
    norm = jnp.maximum(jnp.linalg.norm(enc, axis=-1, keepdims=True), 1e-12)
    normalized = enc / norm * jnp.float32(enc.shape[-1]) ** 0.5
    return normalized @ w_lin.astype(jnp.float32).reshape(-1, 1) \
        + b_lin.astype(jnp.float32).reshape(1, 1)


if __name__ == "__main__":
    key = jax.random.PRNGKey(0)
    k_img, k_enc, k_lin, k_b = jax.random.split(key, 4)

    # Small shapes consistent with the module's forward (images -> [B,1] score)
    B, C, H, W = 2, 3, 16, 16
    F = C * H * W            # 768 flattened image features
    D = 512                  # CLIP ViT-B/32 embedding dim

    images = jax.random.normal(k_img, (B, C, H, W), dtype=jnp.float32)
    w_enc = jax.random.normal(k_enc, (F, D), dtype=jnp.float32) * (1.0 / F ** 0.5)
    w_lin = jax.random.normal(k_lin, (D, 1), dtype=jnp.float32) * (1.0 / D ** 0.5)
    b_lin = jax.random.normal(k_b, (1,), dtype=jnp.float32)

    # Weight prep is a one-time cost (would be reused across calls).
    params = prepare_simulacra_params(w_enc, w_lin, b_lin)

    out = simulacra_aesthetic(images, params)
    out = jax.block_until_ready(out)

    ref = _reference(images, w_enc, w_lin, b_lin)
    assert out.shape == (B, 1), out.shape
    assert jnp.allclose(out, ref, atol=5e-3, rtol=5e-3), (out, ref)
    print("KERNEL_OK")
</pallas_src>

<mosaic_0001>
module attributes {stable_mosaic.version = 11 : i64} {
  func.func @_simulacra_kernel(%arg0: i32, %arg1: i32, %arg2: memref<8x768xf32, #tpu.memory_space<vmem>>, %arg3: memref<768x512xbf16, #tpu.memory_space<vmem>>, %arg4: memref<1x512xf32, #tpu.memory_space<vmem>>, %arg5: memref<1x1xf32, #tpu.memory_space<smem>>, %arg6: memref<8x128xf32, #tpu.memory_space<vmem>>, %arg7: memref<8x512xf32, #tpu.memory_space<vmem>>) attributes {dimension_semantics = [#tpu.dimension_semantics<parallel>, #tpu.dimension_semantics<arbitrary>], iteration_bounds = array<i64: 1, 1>, scalar_prefetch = 0 : i64, scratch_operands = 1 : i64, tpu.core_type = #tpu.core_type<tc>, window_params = [{transform_indices = @transform_0, window_bounds = array<i64: 8, 768>}, {transform_indices = @transform_1, window_bounds = array<i64: 768, 512>}, {pipeline_mode = #tpu.pipeline_mode<synchronous>, transform_indices = @transform_2, window_bounds = array<i64: 1, 512>}, {transform_indices = @transform_3, window_bounds = array<i64: 1, 1>}, {transform_indices = @transform_4, window_bounds = array<i64: 8, 128>}]} {
    %c0_i32 = arith.constant 0 : i32
    %0 = arith.cmpi eq, %arg1, %c0_i32 : i32
    %1 = arith.extui %0 : i1 to i32
    %c0_i32_0 = arith.constant 0 : i32
    %2 = arith.cmpi ne, %1, %c0_i32_0 : i32
    scf.if %2 {
      %cst_10 = arith.constant 0.000000e+00 : f32
      %13 = vector.broadcast %cst_10 : f32 to vector<8x512xf32>
      %c0_11 = arith.constant 0 : index
      %c0_12 = arith.constant 0 : index
      %14 = vector.load %arg7[%c0_11, %c0_12] : memref<8x512xf32, #tpu.memory_space<vmem>>, vector<8x512xf32>
      tpu.vector_store %arg7[%c0_11, %c0_12], %13 {strides = array<i32>} : memref<8x512xf32, #tpu.memory_space<vmem>>, vector<8x512xf32>,
    } else {
    }
    %c0 = arith.constant 0 : index
    %c0_1 = arith.constant 0 : index
    %3 = vector.load %arg7[%c0, %c0_1] : memref<8x512xf32, #tpu.memory_space<vmem>>, vector<8x512xf32>
    %c0_2 = arith.constant 0 : index
    %c0_3 = arith.constant 0 : index
    %4 = vector.load %arg2[%c0_2, %c0_3] : memref<8x768xf32, #tpu.memory_space<vmem>>, vector<8x768xf32>
    %5 = arith.truncf %4 : vector<8x768xf32> to vector<8x768xbf16>
    %c0_4 = arith.constant 0 : index
    %c0_5 = arith.constant 0 : index
    %6 = vector.load %arg3[%c0_4, %c0_5] : memref<768x512xbf16, #tpu.memory_space<vmem>>, vector<768x512xbf16>
    %cst = arith.constant dense<0.000000e+00> : vector<8x512xf32>
    %7 = tpu.matmul %5, %6, %cst {dimension_numbers = #tpu.dot_dimension_numbers<[1], [0], [0], [1], [0, 0, 1, 1], [], []>} : vector<8x768xbf16>, vector<768x512xbf16>, vector<8x512xf32> -> vector<8x512xf32>
    %8 = arith.addf %3, %7 : vector<8x512xf32>
    %c0_6 = arith.constant 0 : index
    %c0_7 = arith.constant 0 : index
    %9 = vector.load %arg7[%c0_6, %c0_7] : memref<8x512xf32, #tpu.memory_space<vmem>>, vector<8x512xf32>
    tpu.vector_store %arg7[%c0_6, %c0_7], %8 {strides = array<i32>} : memref<8x512xf32, #tpu.memory_space<vmem>>, vector<8x512xf32>,
    %c0_i32_8 = arith.constant 0 : i32
    %10 = arith.cmpi eq, %arg1, %c0_i32_8 : i32
    %11 = arith.extui %10 : i1 to i32
    %c0_i32_9 = arith.constant 0 : i32
    %12 = arith.cmpi ne, %11, %c0_i32_9 : i32
    scf.if %12 {
      %c0_10 = arith.constant 0 : index
      %c0_11 = arith.constant 0 : index
      %13 = vector.load %arg7[%c0_10, %c0_11] : memref<8x512xf32, #tpu.memory_space<vmem>>, vector<8x512xf32>
      %14 = arith.mulf %13, %13 : vector<8x512xf32>
      %cst_12 = arith.constant dense<0.000000e+00> : vector<8xf32>
      %15 = vector.multi_reduction <add>, %14, %cst_12 [1] : vector<8x512xf32> to vector<8xf32>
      %16 = vector.shape_cast %15 : vector<8xf32> to vector<8x1xf32>
      %cst_13 = arith.constant 1.000000e-24 : f32
      %17 = vector.broadcast %cst_13 : f32 to vector<8x1xf32>
      %18 = arith.maximumf %16, %17 : vector<8x1xf32>
      %19 = math.rsqrt %18 : vector<8x1xf32>
      %c0_14 = arith.constant 0 : index
      %c0_15 = arith.constant 0 : index
      %20 = vector.load %arg4[%c0_14, %c0_15] : memref<1x512xf32, #tpu.memory_space<vmem>>, vector<1x512xf32>
      %21 = vector.broadcast %20 : vector<1x512xf32> to vector<8x512xf32>
      %22 = arith.mulf %13, %21 : vector<8x512xf32>
      %cst_16 = arith.constant dense<0.000000e+00> : vector<8xf32>
      %23 = vector.multi_reduction <add>, %22, %cst_16 [1] : vector<8x512xf32> to vector<8xf32>
      %24 = vector.shape_cast %23 : vector<8xf32> to vector<8x1xf32>
      %25 = arith.mulf %24, %19 : vector<8x1xf32>
      %cst_17 = arith.constant 5.120000e+02 : f32
      %26 = math.sqrt %cst_17 : f32
      %27 = vector.broadcast %26 : f32 to vector<8x1xf32>
      %28 = arith.mulf %25, %27 : vector<8x1xf32>
      %c0_18 = arith.constant 0 : index
      %c0_19 = arith.constant 0 : index
      %29 = memref.load %arg5[%c0_18, %c0_19] : memref<1x1xf32, #tpu.memory_space<smem>>
      %30 = vector.broadcast %29 : f32 to vector<8x1xf32>
      %31 = arith.addf %28, %30 : vector<8x1xf32>
      %32 = vector.shape_cast %31 : vector<8x1xf32> to vector<8x1xf32>
      %33 = vector.broadcast %32 : vector<8x1xf32> to vector<8x128xf32>
      %c0_20 = arith.constant 0 : index
      %c0_21 = arith.constant 0 : index
      %34 = vector.load %arg6[%c0_20, %c0_21] : memref<8x128xf32, #tpu.memory_space<vmem>>, vector<8x128xf32>
      tpu.vector_store %arg6[%c0_20, %c0_21], %33 {strides = array<i32>} : memref<8x128xf32, #tpu.memory_space<vmem>>, vector<8x128xf32>,
    } else {
    }
    return
  }
  func.func @transform_0(%arg0: i32, %arg1: i32) -> (i32, i32) {
    %c0_i32 = arith.constant 0 : i32
    return %arg0, %arg1 : i32, i32
  }
  func.func @transform_1(%arg0: i32, %arg1: i32) -> (i32, i32) {
    %c0_i32 = arith.constant 0 : i32
    %c0_i32_0 = arith.constant 0 : i32
    return %arg1, %c0_i32 : i32, i32
  }
  func.func @transform_2(%arg0: i32, %arg1: i32) -> (i32, i32) {
    %c0_i32 = arith.constant 0 : i32
    %c0_i32_0 = arith.constant 0 : i32
    %c0_i32_1 = arith.constant 0 : i32
    return %c0_i32, %c0_i32_0 : i32, i32
  }
  func.func @transform_3(%arg0: i32, %arg1: i32) -> (i32, i32) {
    %c0_i32 = arith.constant 0 : i32
    %c0_i32_0 = arith.constant 0 : i32
    %c0_i32_1 = arith.constant 0 : i32
    return %c0_i32, %c0_i32_0 : i32, i32
  }
  func.func @transform_4(%arg0: i32, %arg1: i32) -> (i32, i32) {
    %c0_i32 = arith.constant 0 : i32
    %c0_i32_0 = arith.constant 0 : i32
    return %arg0, %c0_i32 : i32, i32
  }
}

</mosaic_0001>

<llo_original>
// kernel: tpu_custom_call.1
$region0: #{tpu_custom_call.1}
  #allocation0 [shape = 'u32[]', space=smem, size = 0x4, offset = 0x4, fixed_abs, tag = 'smem constant byte address 0x4 - core index']
  #allocation1 [shape = 'u32[144,128]{1,0:T(1,128)}', space=vmem, size = 0x12000, scoped, tag = 'internal scratch']
  #allocation2 [shape = 'f32[8,512]{1,0:T(8,128)}', space=vmem, size = 0x4000, scoped, tag = 'scratch operand']
  #allocation3 [shape = 'f32[1,1]{1,0:T(1,128)S(6)}', space=smem, size = 0x200, scoped, tag = 'scoped memory for tpu_custom_call.1']
  %s0 = inlined_call_operand.hbm [shape: f32[8,768], index: 0, kind: input, shape index: {}]
  %s1 = inlined_call_operand.hbm [shape: bf16[768,512], index: 1, kind: input, shape index: {}]
  %s2 = inlined_call_operand.vmem [shape: f32[1,512], index: 2, kind: input, shape index: {}]
  %s3 = inlined_call_operand.<no memory space> [shape: f32[1,1], index: 3, kind: input, shape index: {}]
  %s4 = inlined_call_operand.hbm [shape: f32[8,128], index: 4, kind: output, shape index: {}]
  %s5 = sld [smem:[#allocation0]]
  $region42: #{tpu_custom_call.1} parent=0
    _
  %s7 = ssub.s32 1, %s5
  %s8 = scalar_select 0, %s7, %s5
  %9 = sst [smem:[#allocation3]] %s3
  $region1: #{tpu_custom_call.1} parent=0
    #allocation4 [shape = 'u8[24576]{0}', space=vmem, size = 0x6000, scoped, tag = 'input window, operand 0, single buffered']
    #allocation5 [shape = 's32[1]{0}', space=sflag, size = 0x4, scoped, tag = 'scoped memory for tpu_custom_call.1']
    #allocation6 [shape = 's32[1]{0}', space=sflag, size = 0x4, scoped, tag = 'scoped memory for tpu_custom_call.1']
    #allocation7 [shape = 'u8[786432]{0}', space=vmem, size = 0xc0000, scoped, tag = 'input window, operand 1, single buffered']
    #allocation8 [shape = 's32[1]{0}', space=sflag, size = 0x4, scoped, tag = 'scoped memory for tpu_custom_call.1']
    #allocation9 [shape = 'u8[4096]{0}', space=vmem, size = 0x1000, scoped, tag = 'output window, operand 0, single buffered']
    %10 = vsyncpa [#allocation5], 0
    %11 = vsyncpa [#allocation8], 0
    %12 = vsyncpa [#allocation6], 0
    // Predicated region
    $region2: #{tpu_custom_call.1} parent=1 // pred_check
      _
    $region3: #{tpu_custom_call.1} parent=1 // pred_check_branch
      %14 = sbr.rel (0) target = $region5
    $region4: #{tpu_custom_call.1} parent=1 // pred_region
      %s16 = ssub.s32 768, 768
      %17 = vsyncadd [#allocation5], %s16
      %s19 = sshll.u32 [#allocation4], 4
      %s20 = int_to_ptr.vmem [resolvable:$true] %s19
      %22 = dma.hbm_to_vmem [thread:$0]  %s0, 768, %s20, [#allocation5]
    $region5: #{tpu_custom_call.1} parent=1 // pred_fallthru
      _
    // Predicated region
    $region6: #{tpu_custom_call.1} parent=1 // pred_check
      _
    $region7: #{tpu_custom_call.1} parent=1 // pred_check_branch
      %24 = sbr.rel (0) target = $region9
    $region8: #{tpu_custom_call.1} parent=1 // pred_region
      %s26 = ssub.s32 24576, 24576
      %27 = vsyncadd [#allocation8], %s26
      %s28 = sshll.u32 [#allocation7], 4
      %s29 = int_to_ptr.vmem [resolvable:$true] %s28
      %34 = dma.hbm_to_vmem [thread:$0]  %s1, 24576, %s29, [#allocation8], 256, 256, 16
    $region9: #{tpu_custom_call.1} parent=1 // pred_fallthru
      _
    // Predicated region
    $region10: #{tpu_custom_call.1} parent=1 // pred_check
      _
    $region11: #{tpu_custom_call.1} parent=1 // pred_check_branch
      %36 = sbr.rel (0) target = $region13
    $region12: #{tpu_custom_call.1} parent=1 // pred_region
      _
    $region13: #{tpu_custom_call.1} parent=1 // pred_fallthru
      _
    // Predicated region
    $region14: #{tpu_custom_call.1} parent=1 // pred_check
      _
    $region15: #{tpu_custom_call.1} parent=1 // pred_check_branch
      %38 = sbr.rel (0) target = $region17
    $region16: #{tpu_custom_call.1} parent=1 // pred_region
      _
    $region17: #{tpu_custom_call.1} parent=1 // pred_fallthru
      _
    // Predicated region
    $region18: #{tpu_custom_call.1} parent=1 // pred_check
      _
    $region19: #{tpu_custom_call.1} parent=1 // pred_check_branch
      %40 = sbr.rel (0) target = $region21
    $region20: #{tpu_custom_call.1} parent=1 // pred_region
      %41 = dma.done [#allocation5], 768
    $region21: #{tpu_custom_call.1} parent=1 // pred_fallthru
      _
    // Predicated region
    $region22: #{tpu_custom_call.1} parent=1 // pred_check
      _
    $region23: #{tpu_custom_call.1} parent=1 // pred_check_branch
      %43 = sbr.rel (0) target = $region25
    $region24: #{tpu_custom_call.1} parent=1 // pred_region
      %44 = dma.done [#allocation8], 24576
    $region25: #{tpu_custom_call.1} parent=1 // pred_fallthru
      _
    %p45 = scmp.eq.s32.totalorder 0, 0
    // Predicated region
    $region26: #{tpu_custom_call.1} parent=1 // pred_check
      %p46 = pneg %p45
    $region27: #{tpu_custom_call.1} parent=1 // pred_check_branch
      %48 = sbr.rel (%p46) target = $region29
    $region28: #{tpu_custom_call.1} parent=1 // pred_region
      %49 = vst [vmem:[#allocation2] sm:$0xff] 0.0
      %50 = vst [vmem:[#allocation2 + $0x8] sm:$0xff] 0.0
      %51 = vst [vmem:[#allocation2 + $0x10] sm:$0xff] 0.0
      %52 = vst [vmem:[#allocation2 + $0x18] sm:$0xff] 0.0
    $region29: #{tpu_custom_call.1} parent=1 // pred_fallthru
      _
    %v53 = vld [vmem:[#allocation2] sm:$0xff]
    %v54 = vld [vmem:[#allocation2 + $0x8] sm:$0xff]
    %v55 = vld [vmem:[#allocation2 + $0x10] sm:$0xff]
    %v56 = vld [vmem:[#allocation2 + $0x18] sm:$0xff]
    %v57 = vld [vmem:[#allocation4] sm:$0xff]
    %v58 = vld [vmem:[#allocation4 + $0x8] sm:$0xff]
    %v59 = vld [vmem:[#allocation4 + $0x10] sm:$0xff]
    %v60 = vld [vmem:[#allocation4 + $0x18] sm:$0xff]
    %v61 = vld [vmem:[#allocation4 + $0x20] sm:$0xff]
    %v62 = vld [vmem:[#allocation4 + $0x28] sm:$0xff]
    %v63 = vpack.c.bf16 %v57, %v57
    %v64 = vpack.c.bf16 %v58, %v58
    %v65 = vpack.c.bf16 %v59, %v59
    %v66 = vpack.c.bf16 %v60, %v60
    %v67 = vpack.c.bf16 %v61, %v61
    %v68 = vpack.c.bf16 %v62, %v62
    %v69 = vld [vmem:[#allocation7] sm:$0xff]
    %v70 = vld [vmem:[#allocation7 + $0x8] sm:$0xff]
    %v71 = vld [vmem:[#allocation7 + $0x10] sm:$0xff]
    %v72 = vld [vmem:[#allocation7 + $0x18] sm:$0xff]
    %v73 = vld [vmem:[#allocation7 + $0x20] sm:$0xff]
    %v74 = vld [vmem:[#allocation7 + $0x28] sm:$0xff]
    %v75 = vld [vmem:[#allocation7 + $0x30] sm:$0xff]
    %v76 = vld [vmem:[#allocation7 + $0x38] sm:$0xff]
    %v77 = vld [vmem:[#allocation7 + $0x40] sm:$0xff]
    %v78 = vld [vmem:[#allocation7 + $0x48] sm:$0xff]
    %v79 = vld [vmem:[#allocation7 + $0x50] sm:$0xff]
    %v80 = vld [vmem:[#allocation7 + $0x58] sm:$0xff]
    %v81 = vld [vmem:[#allocation7 + $0x60] sm:$0xff]
    %v82 = vld [vmem:[#allocation7 + $0x68] sm:$0xff]
    %v83 = vld [vmem:[#allocation7 + $0x70] sm:$0xff]
    %v84 = vld [vmem:[#allocation7 + $0x78] sm:$0xff]
    %v85 = vld [vmem:[#allocation7 + $0x80] sm:$0xff]
    %v86 = vld [vmem:[#allocation7 + $0x88] sm:$0xff]
    %v87 = vld [vmem:[#allocation7 + $0x90] sm:$0xff]
    %v88 = vld [vmem:[#allocation7 + $0x98] sm:$0xff]
    %v89 = vld [vmem:[#allocation7 + $0xa0] sm:$0xff]
    %v90 = vld [vmem:[#allocation7 + $0xa8] sm:$0xff]
    %v91 = vld [vmem:[#allocation7 + $0xb0] sm:$0xff]
    %v92 = vld [vmem:[#allocation7 + $0xb8] sm:$0xff]
    %v93 = vld [vmem:[#allocation7 + $0xc0] sm:$0xff]
    %v94 = vld [vmem:[#allocation7 + $0xc8] sm:$0xff]
    %v95 = vld [vmem:[#allocation7 + $0xd0] sm:$0xff]
    %v96 = vld [vmem:[#allocation7 + $0xd8] sm:$0xff]
    %v97 = vld [vmem:[#allocation7 + $0xe0] sm:$0xff]
    %v98 = vld [vmem:[#allocation7 + $0xe8] sm:$0xff]
    %v99 = vld [vmem:[#allocation7 + $0xf0] sm:$0xff]
    %v100 = vld [vmem:[#allocation7 + $0xf8] sm:$0xff]
    %v101 = vld [vmem:[#allocation7 + $0x100] sm:$0xff]
    %v102 = vld [vmem:[#allocation7 + $0x108] sm:$0xff]
    %v103 = vld [vmem:[#allocation7 + $0x110] sm:$0xff]
    %v104 = vld [vmem:[#allocation7 + $0x118] sm:$0xff]
    %v105 = vld [vmem:[#allocation7 + $0x120] sm:$0xff]
    %v106 = vld [vmem:[#allocation7 + $0x128] sm:$0xff]
    %v107 = vld [vmem:[#allocation7 + $0x130] sm:$0xff]
    %v108 = vld [vmem:[#allocation7 + $0x138] sm:$0xff]
    %v109 = vld [vmem:[#allocation7 + $0x140] sm:$0xff]
    %v110 = vld [vmem:[#allocation7 + $0x148] sm:$0xff]
    %v111 = vld [vmem:[#allocation7 + $0x150] sm:$0xff]
    %v112 = vld [vmem:[#allocation7 + $0x158] sm:$0xff]
    %v113 = vld [vmem:[#allocation7 + $0x160] sm:$0xff]
    %v114 = vld [vmem:[#allocation7 + $0x168] sm:$0xff]
    %v115 = vld [vmem:[#allocation7 + $0x170] sm:$0xff]
    %v116 = vld [vmem:[#allocation7 + $0x178] sm:$0xff]
    %v117 = vld [vmem:[#allocation7 + $0x180] sm:$0xff]
    %v118 = vld [vmem:[#allocation7 + $0x188] sm:$0xff]
    %v119 = vld [vmem:[#allocation7 + $0x190] sm:$0xff]
    %v120 = vld [vmem:[#allocation7 + $0x198] sm:$0xff]
    %v121 = vld [vmem:[#allocation7 + $0x1a0] sm:$0xff]
    %v122 = vld [vmem:[#allocation7 + $0x1a8] sm:$0xff]
    %v123 = vld [vmem:[#allocation7 + $0x1b0] sm:$0xff]
    %v124 = vld [vmem:[#allocation7 + $0x1b8] sm:$0xff]
    %v125 = vld [vmem:[#allocation7 + $0x1c0] sm:$0xff]
    %v126 = vld [vmem:[#allocation7 + $0x1c8] sm:$0xff]
    %v127 = vld [vmem:[#allocation7 + $0x1d0] sm:$0xff]
    %v128 = vld [vmem:[#allocation7 + $0x1d8] sm:$0xff]
    %v129 = vld [vmem:[#allocation7 + $0x1e0] sm:$0xff]
    %v130 = vld [vmem:[#allocation7 + $0x1e8] sm:$0xff]
    %v131 = vld [vmem:[#allocation7 + $0x1f0] sm:$0xff]
    %v132 = vld [vmem:[#allocation7 + $0x1f8] sm:$0xff]
    %v133 = vld [vmem:[#allocation7 + $0x200] sm:$0xff]
    %v134 = vld [vmem:[#allocation7 + $0x208] sm:$0xff]
    %v135 = vld [vmem:[#allocation7 + $0x210] sm:$0xff]
    %v136 = vld [vmem:[#allocation7 + $0x218] sm:$0xff]
    %v137 = vld [vmem:[#allocation7 + $0x220] sm:$0xff]
    %v138 = vld [vmem:[#allocation7 + $0x228] sm:$0xff]
    %v139 = vld [vmem:[#allocation7 + $0x230] sm:$0xff]
    %v140 = vld [vmem:[#allocation7 + $0x238] sm:$0xff]
    %v141 = vld [vmem:[#allocation7 + $0x240] sm:$0xff]
    %v142 = vld [vmem:[#allocation7 + $0x248] sm:$0xff]
    %v143 = vld [vmem:[#allocation7 + $0x250] sm:$0xff]
    %v144 = vld [vmem:[#allocation7 + $0x258] sm:$0xff]
    %v145 = vld [vmem:[#allocation7 + $0x260] sm:$0xff]
    %v146 = vld [vmem:[#allocation7 + $0x268] sm:$0xff]
    %v147 = vld [vmem:[#allocation7 + $0x270] sm:$0xff]
    %v148 = vld [vmem:[#allocation7 + $0x278] sm:$0xff]
    %v149 = vld [vmem:[#allocation7 + $0x280] sm:$0xff]
    %v150 = vld [vmem:[#allocation7 + $0x288] sm:$0xff]
    %v151 = vld [vmem:[#allocation7 + $0x290] sm:$0xff]
    %v152 = vld [vmem:[#allocation7 + $0x298] sm:$0xff]
    %v153 = vld [vmem:[#allocation7 + $0x2a0] sm:$0xff]
    %v154 = vld [vmem:[#allocation7 + $0x2a8] sm:$0xff]
    %v155 = vld [vmem:[#allocation7 + $0x2b0] sm:$0xff]
    %v156 = vld [vmem:[#allocation7 + $0x2b8] sm:$0xff]
    %v157 = vld [vmem:[#allocation7 + $0x2c0] sm:$0xff]
    %v158 = vld [vmem:[#allocation7 + $0x2c8] sm:$0xff]
    %v159 = vld [vmem:[#allocation7 + $0x2d0] sm:$0xff]
    %v160 = vld [vmem:[#allocation7 + $0x2d8] sm:$0xff]
    %v161 = vld [vmem:[#allocation7 + $0x2e0] sm:$0xff]
    %v162 = vld [vmem:[#allocation7 + $0x2e8] sm:$0xff]
    %v163 = vld [vmem:[#allocation7 + $0x2f0] sm:$0xff]
    %v164 = vld [vmem:[#allocation7 + $0x2f8] sm:$0xff]
    %v165 = vld [vmem:[#allocation7 + $0x300] sm:$0xff]
    %v166 = vld [vmem:[#allocation7 + $0x308] sm:$0xff]
    %v167 = vld [vmem:[#allocation7 + $0x310] sm:$0xff]
    %v168 = vld [vmem:[#allocation7 + $0x318] sm:$0xff]
    %v169 = vld [vmem:[#allocation7 + $0x320] sm:$0xff]
    %v170 = vld [vmem:[#allocation7 + $0x328] sm:$0xff]
    %v171 = vld [vmem:[#allocation7 + $0x330] sm:$0xff]
    %v172 = vld [vmem:[#allocation7 + $0x338] sm:$0xff]
    %v173 = vld [vmem:[#allocation7 + $0x340] sm:$0xff]
    %v174 = vld [vmem:[#allocation7 + $0x348] sm:$0xff]
    %v175 = vld [vmem:[#allocation7 + $0x350] sm:$0xff]
    %v176 = vld [vmem:[#allocation7 + $0x358] sm:$0xff]
    %v177 = vld [vmem:[#allocation7 + $0x360] sm:$0xff]
    %v178 = vld [vmem:[#allocation7 + $0x368] sm:$0xff]
    %v179 = vld [vmem:[#allocation7 + $0x370] sm:$0xff]
    %v180 = vld [vmem:[#allocation7 + $0x378] sm:$0xff]
    %v181 = vld [vmem:[#allocation7 + $0x380] sm:$0xff]
    %v182 = vld [vmem:[#allocation7 + $0x388] sm:$0xff]
    %v183 = vld [vmem:[#allocation7 + $0x390] sm:$0xff]
    %v184 = vld [vmem:[#allocation7 + $0x398] sm:$0xff]
    %v185 = vld [vmem:[#allocation7 + $0x3a0] sm:$0xff]
    %v186 = vld [vmem:[#allocation7 + $0x3a8] sm:$0xff]
    %v187 = vld [vmem:[#allocation7 + $0x3b0] sm:$0xff]
    %v188 = vld [vmem:[#allocation7 + $0x3b8] sm:$0xff]
    %v189 = vld [vmem:[#allocation7 + $0x3c0] sm:$0xff]
    %v190 = vld [vmem:[#allocation7 + $0x3c8] sm:$0xff]
    %v191 = vld [vmem:[#allocation7 + $0x3d0] sm:$0xff]
    %v192 = vld [vmem:[#allocation7 + $0x3d8] sm:$0xff]
    %v193 = vld [vmem:[#allocation7 + $0x3e0] sm:$0xff]
    %v194 = vld [vmem:[#allocation7 + $0x3e8] sm:$0xff]
    %v195 = vld [vmem:[#allocation7 + $0x3f0] sm:$0xff]
    %v196 = vld [vmem:[#allocation7 + $0x3f8] sm:$0xff]
    %v197 = vld [vmem:[#allocation7 + $0x400] sm:$0xff]
    %v198 = vld [vmem:[#allocation7 + $0x408] sm:$0xff]
    %v199 = vld [vmem:[#allocation7 + $0x410] sm:$0xff]
    %v200 = vld [vmem:[#allocation7 + $0x418] sm:$0xff]
    %v201 = vld [vmem:[#allocation7 + $0x420] sm:$0xff]
    %v202 = vld [vmem:[#allocation7 + $0x428] sm:$0xff]
    %v203 = vld [vmem:[#allocation7 + $0x430] sm:$0xff]
    %v204 = vld [vmem:[#allocation7 + $0x438] sm:$0xff]
    %v205 = vld [vmem:[#allocation7 + $0x440] sm:$0xff]
    %v206 = vld [vmem:[#allocation7 + $0x448] sm:$0xff]
    %v207 = vld [vmem:[#allocation7 + $0x450] sm:$0xff]
    %v208 = vld [vmem:[#allocation7 + $0x458] sm:$0xff]
    %v209 = vld [vmem:[#allocation7 + $0x460] sm:$0xff]
    %v210 = vld [vmem:[#allocation7 + $0x468] sm:$0xff]
    %v211 = vld [vmem:[#allocation7 + $0x470] sm:$0xff]
    %v212 = vld [vmem:[#allocation7 + $0x478] sm:$0xff]
    %v213 = vld [vmem:[#allocation7 + $0x480] sm:$0xff]
    %v214 = vld [vmem:[#allocation7 + $0x488] sm:$0xff]
    %v215 = vld [vmem:[#allocation7 + $0x490] sm:$0xff]
    %v216 = vld [vmem:[#allocation7 + $0x498] sm:$0xff]
    %v217 = vld [vmem:[#allocation7 + $0x4a0] sm:$0xff]
    %v218 = vld [vmem:[#allocation7 + $0x4a8] sm:$0xff]
    %v219 = vld [vmem:[#allocation7 + $0x4b0] sm:$0xff]
    %v220 = vld [vmem:[#allocation7 + $0x4b8] sm:$0xff]
    %v221 = vld [vmem:[#allocation7 + $0x4c0] sm:$0xff]
    %v222 = vld [vmem:[#allocation7 + $0x4c8] sm:$0xff]
    %v223 = vld [vmem:[#allocation7 + $0x4d0] sm:$0xff]
    %v224 = vld [vmem:[#allocation7 + $0x4d8] sm:$0xff]
    %v225 = vld [vmem:[#allocation7 + $0x4e0] sm:$0xff]
    %v226 = vld [vmem:[#allocation7 + $0x4e8] sm:$0xff]
    %v227 = vld [vmem:[#allocation7 + $0x4f0] sm:$0xff]
    %v228 = vld [vmem:[#allocation7 + $0x4f8] sm:$0xff]
    %v229 = vld [vmem:[#allocation7 + $0x500] sm:$0xff]
    %v230 = vld [vmem:[#allocation7 + $0x508] sm:$0xff]
    %v231 = vld [vmem:[#allocation7 + $0x510] sm:$0xff]
    %v232 = vld [vmem:[#allocation7 + $0x518] sm:$0xff]
    %v233 = vld [vmem:[#allocation7 + $0x520] sm:$0xff]
    %v234 = vld [vmem:[#allocation7 + $0x528] sm:$0xff]
    %v235 = vld [vmem:[#allocation7 + $0x530] sm:$0xff]
    %v236 = vld [vmem:[#allocation7 + $0x538] sm:$0xff]
    %v237 = vld [vmem:[#allocation7 + $0x540] sm:$0xff]
    %v238 = vld [vmem:[#allocation7 + $0x548] sm:$0xff]
    %v239 = vld [vmem:[#allocation7 + $0x550] sm:$0xff]
    %v240 = vld [vmem:[#allocation7 + $0x558] sm:$0xff]
    %v241 = vld [vmem:[#allocation7 + $0x560] sm:$0xff]
    %v242 = vld [vmem:[#allocation7 + $0x568] sm:$0xff]
    %v243 = vld [vmem:[#allocation7 + $0x570] sm:$0xff]
    %v244 = vld [vmem:[#allocation7 + $0x578] sm:$0xff]
    %v245 = vld [vmem:[#allocation7 + $0x580] sm:$0xff]
    %v246 = vld [vmem:[#allocation7 + $0x588] sm:$0xff]
    %v247 = vld [vmem:[#allocation7 + $0x590] sm:$0xff]
    %v248 = vld [vmem:[#allocation7 + $0x598] sm:$0xff]
    %v249 = vld [vmem:[#allocation7 + $0x5a0] sm:$0xff]
    %v250 = vld [vmem:[#allocation7 + $0x5a8] sm:$0xff]
    %v251 = vld [vmem:[#allocation7 + $0x5b0] sm:$0xff]
    %v252 = vld [vmem:[#allocation7 + $0x5b8] sm:$0xff]
    %v253 = vld [vmem:[#allocation7 + $0x5c0] sm:$0xff]
    %v254 = vld [vmem:[#allocation7 + $0x5c8] sm:$0xff]
    %v255 = vld [vmem:[#allocation7 + $0x5d0] sm:$0xff]
    %v256 = vld [vmem:[#allocation7 + $0x5d8] sm:$0xff]
    %v257 = vld [vmem:[#allocation7 + $0x5e0] sm:$0xff]
    %v258 = vld [vmem:[#allocation7 + $0x5e8] sm:$0xff]
    %v259 = vld [vmem:[#allocation7 + $0x5f0] sm:$0xff]
    %v260 = vld [vmem:[#allocation7 + $0x5f8] sm:$0xff]
    %v453 = vunpack.c.l.b16 %v69
    %v454 = vunpack.c.h.b16 %v69
    %v455 = vunpack.c.l.b16 %v70
    %v456 = vunpack.c.h.b16 %v70
    %v457 = vunpack.c.l.b16 %v71
    %v458 = vunpack.c.h.b16 %v71
    %v459 = vunpack.c.l.b16 %v72
    %v460 = vunpack.c.h.b16 %v72
    %v461 = vunpack.c.l.b16 %v73
    %v462 = vunpack.c.h.b16 %v73
    %v463 = vunpack.c.l.b16 %v74
    %v464 = vunpack.c.h.b16 %v74
    %v465 = vunpack.c.l.b16 %v75
    %v466 = vunpack.c.h.b16 %v75
    %v467 = vunpack.c.l.b16 %v76
    %v468 = vunpack.c.h.b16 %v76
    %v469 = vunpack.c.l.b16 %v77
    %v470 = vunpack.c.h.b16 %v77
    %v471 = vunpack.c.l.b16 %v78
    %v472 = vunpack.c.h.b16 %v78
    %v473 = vunpack.c.l.b16 %v79
    %v474 = vunpack.c.h.b16 %v79
    %v475 = vunpack.c.l.b16 %v80
    %v476 = vunpack.c.h.b16 %v80
    %v477 = vunpack.c.l.b16 %v81
    %v478 = vunpack.c.h.b16 %v81
    %v479 = vunpack.c.l.b16 %v82
    %v480 = vunpack.c.h.b16 %v82
    %v481 = vunpack.c.l.b16 %v83
    %v482 = vunpack.c.h.b16 %v83
    %v483 = vunpack.c.l.b16 %v84
    %v484 = vunpack.c.h.b16 %v84
    %v485 = vunpack.c.l.b16 %v85
    %v486 = vunpack.c.h.b16 %v85
    %v487 = vunpack.c.l.b16 %v86
    %v488 = vunpack.c.h.b16 %v86
    %v489 = vunpack.c.l.b16 %v87
    %v490 = vunpack.c.h.b16 %v87
    %v491 = vunpack.c.l.b16 %v88
    %v492 = vunpack.c.h.b16 %v88
    %v493 = vunpack.c.l.b16 %v89
    %v494 = vunpack.c.h.b16 %v89
    %v495 = vunpack.c.l.b16 %v90
    %v496 = vunpack.c.h.b16 %v90
    %v497 = vunpack.c.l.b16 %v91
    %v498 = vunpack.c.h.b16 %v91
    %v499 = vunpack.c.l.b16 %v92
    %v500 = vunpack.c.h.b16 %v92
    %v501 = vunpack.c.l.b16 %v93
    %v502 = vunpack.c.h.b16 %v93
    %v503 = vunpack.c.l.b16 %v94
    %v504 = vunpack.c.h.b16 %v94
    %v505 = vunpack.c.l.b16 %v95
    %v506 = vunpack.c.h.b16 %v95
    %v507 = vunpack.c.l.b16 %v96
    %v508 = vunpack.c.h.b16 %v96
    %v509 = vunpack.c.l.b16 %v97
    %v510 = vunpack.c.h.b16 %v97
    %v511 = vunpack.c.l.b16 %v98
    %v512 = vunpack.c.h.b16 %v98
    %v513 = vunpack.c.l.b16 %v99
    %v514 = vunpack.c.h.b16 %v99
    %v515 = vunpack.c.l.b16 %v100
    %v516 = vunpack.c.h.b16 %v100
    %v517 = vunpack.c.l.b16 %v101
    %v518 = vunpack.c.h.b16 %v101
    %v519 = vunpack.c.l.b16 %v102
    %v520 = vunpack.c.h.b16 %v102
    %v521 = vunpack.c.l.b16 %v103
    %v522 = vunpack.c.h.b16 %v103
    %v523 = vunpack.c.l.b16 %v104
    %v524 = vunpack.c.h.b16 %v104
    %v525 = vunpack.c.l.b16 %v105
    %v526 = vunpack.c.h.b16 %v105
    %v527 = vunpack.c.l.b16 %v106
    %v528 = vunpack.c.h.b16 %v106
    %v529 = vunpack.c.l.b16 %v107
    %v530 = vunpack.c.h.b16 %v107
    %v531 = vunpack.c.l.b16 %v108
    %v532 = vunpack.c.h.b16 %v108
    %v533 = vunpack.c.l.b16 %v109
    %v534 = vunpack.c.h.b16 %v109
    %v535 = vunpack.c.l.b16 %v110
    %v536 = vunpack.c.h.b16 %v110
    %v537 = vunpack.c.l.b16 %v111
    %v538 = vunpack.c.h.b16 %v111
    %v539 = vunpack.c.l.b16 %v112
    %v540 = vunpack.c.h.b16 %v112
    %v541 = vunpack.c.l.b16 %v113
    %v542 = vunpack.c.h.b16 %v113
    %v543 = vunpack.c.l.b16 %v114
    %v544 = vunpack.c.h.b16 %v114
    %v545 = vunpack.c.l.b16 %v115
    %v546 = vunpack.c.h.b16 %v115
    %v547 = vunpack.c.l.b16 %v116
    %v548 = vunpack.c.h.b16 %v116
    %v549 = vunpack.c.l.b16 %v117
    %v550 = vunpack.c.h.b16 %v117
    %v551 = vunpack.c.l.b16 %v118
    %v552 = vunpack.c.h.b16 %v118
    %v553 = vunpack.c.l.b16 %v119
    %v554 = vunpack.c.h.b16 %v119
    %v555 = vunpack.c.l.b16 %v120
    %v556 = vunpack.c.h.b16 %v120
    %v557 = vunpack.c.l.b16 %v121
    %v558 = vunpack.c.h.b16 %v121
    %v559 = vunpack.c.l.b16 %v122
    %v560 = vunpack.c.h.b16 %v122
    %v561 = vunpack.c.l.b16 %v123
    %v562 = vunpack.c.h.b16 %v123
    %v563 = vunpack.c.l.b16 %v124
    %v564 = vunpack.c.h.b16 %v124
    %v565 = vunpack.c.l.b16 %v125
    %v566 = vunpack.c.h.b16 %v125
    %v567 = vunpack.c.l.b16 %v126
    %v568 = vunpack.c.h.b16 %v126
    %v569 = vunpack.c.l.b16 %v127
    %v570 = vunpack.c.h.b16 %v127
    %v571 = vunpack.c.l.b16 %v128
    %v572 = vunpack.c.h.b16 %v128
    %v573 = vunpack.c.l.b16 %v129
    %v574 = vunpack.c.h.b16 %v129
    %v575 = vunpack.c.l.b16 %v130
    %v576 = vunpack.c.h.b16 %v130
    %v577 = vunpack.c.l.b16 %v131
    %v578 = vunpack.c.h.b16 %v131
    %v579 = vunpack.c.l.b16 %v132
    %v580 = vunpack.c.h.b16 %v132
    %v581 = vunpack.c.l.b16 %v133
    %v582 = vunpack.c.h.b16 %v133
    %v583 = vunpack.c.l.b16 %v134
    %v584 = vunpack.c.h.b16 %v134
    %v585 = vunpack.c.l.b16 %v135
    %v586 = vunpack.c.h.b16 %v135
    %v587 = vunpack.c.l.b16 %v136
    %v588 = vunpack.c.h.b16 %v136
    %v589 = vunpack.c.l.b16 %v137
    %v590 = vunpack.c.h.b16 %v137
    %v591 = vunpack.c.l.b16 %v138
    %v592 = vunpack.c.h.b16 %v138
    %v593 = vunpack.c.l.b16 %v139
    %v594 = vunpack.c.h.b16 %v139
    %v595 = vunpack.c.l.b16 %v140
    %v596 = vunpack.c.h.b16 %v140
    %v597 = vunpack.c.l.b16 %v141
    %v598 = vunpack.c.h.b16 %v141
    %v599 = vunpack.c.l.b16 %v142
    %v600 = vunpack.c.h.b16 %v142
    %v601 = vunpack.c.l.b16 %v143
    %v602 = vunpack.c.h.b16 %v143
    %v603 = vunpack.c.l.b16 %v144
    %v604 = vunpack.c.h.b16 %v144
    %v605 = vunpack.c.l.b16 %v145
    %v606 = vunpack.c.h.b16 %v145
    %v607 = vunpack.c.l.b16 %v146
    %v608 = vunpack.c.h.b16 %v146
    %v609 = vunpack.c.l.b16 %v147
    %v610 = vunpack.c.h.b16 %v147
    %v611 = vunpack.c.l.b16 %v148
    %v612 = vunpack.c.h.b16 %v148
    %v613 = vunpack.c.l.b16 %v149
    %v614 = vunpack.c.h.b16 %v149
    %v615 = vunpack.c.l.b16 %v150
    %v616 = vunpack.c.h.b16 %v150
    %v617 = vunpack.c.l.b16 %v151
    %v618 = vunpack.c.h.b16 %v151
    %v619 = vunpack.c.l.b16 %v152
    %v620 = vunpack.c.h.b16 %v152
    %v621 = vunpack.c.l.b16 %v153
    %v622 = vunpack.c.h.b16 %v153
    %v623 = vunpack.c.l.b16 %v154
    %v624 = vunpack.c.h.b16 %v154
    %v625 = vunpack.c.l.b16 %v155
    %v626 = vunpack.c.h.b16 %v155
    %v627 = vunpack.c.l.b16 %v156
    %v628 = vunpack.c.h.b16 %v156
    %v629 = vunpack.c.l.b16 %v157
    %v630 = vunpack.c.h.b16 %v157
    %v631 = vunpack.c.l.b16 %v158
    %v632 = vunpack.c.h.b16 %v158
    %v633 = vunpack.c.l.b16 %v159
    %v634 = vunpack.c.h.b16 %v159
    %v635 = vunpack.c.l.b16 %v160
    %v636 = vunpack.c.h.b16 %v160
    %v637 = vunpack.c.l.b16 %v161
    %v638 = vunpack.c.h.b16 %v161
    %v639 = vunpack.c.l.b16 %v162
    %v640 = vunpack.c.h.b16 %v162
    %v641 = vunpack.c.l.b16 %v163
    %v642 = vunpack.c.h.b16 %v163
    %v643 = vunpack.c.l.b16 %v164
    %v644 = vunpack.c.h.b16 %v164
    %v645 = vunpack.c.l.b16 %v165
    %v646 = vunpack.c.h.b16 %v165
    %v647 = vunpack.c.l.b16 %v166
    %v648 = vunpack.c.h.b16 %v166
    %v649 = vunpack.c.l.b16 %v167
    %v650 = vunpack.c.h.b16 %v167
    %v651 = vunpack.c.l.b16 %v168
    %v652 = vunpack.c.h.b16 %v168
    %v653 = vunpack.c.l.b16 %v169
    %v654 = vunpack.c.h.b16 %v169
    %v655 = vunpack.c.l.b16 %v170
    %v656 = vunpack.c.h.b16 %v170
    %v657 = vunpack.c.l.b16 %v171
    %v658 = vunpack.c.h.b16 %v171
    %v659 = vunpack.c.l.b16 %v172
    %v660 = vunpack.c.h.b16 %v172
    %v661 = vunpack.c.l.b16 %v173
    %v662 = vunpack.c.h.b16 %v173
    %v663 = vunpack.c.l.b16 %v174
    %v664 = vunpack.c.h.b16 %v174
    %v665 = vunpack.c.l.b16 %v175
    %v666 = vunpack.c.h.b16 %v175
    %v667 = vunpack.c.l.b16 %v176
    %v668 = vunpack.c.h.b16 %v176
    %v669 = vunpack.c.l.b16 %v177
    %v670 = vunpack.c.h.b16 %v177
    %v671 = vunpack.c.l.b16 %v178
    %v672 = vunpack.c.h.b16 %v178
    %v673 = vunpack.c.l.b16 %v179
    %v674 = vunpack.c.h.b16 %v179
    %v675 = vunpack.c.l.b16 %v180
    %v676 = vunpack.c.h.b16 %v180
    %v677 = vunpack.c.l.b16 %v181
    %v678 = vunpack.c.h.b16 %v181
    %v679 = vunpack.c.l.b16 %v182
    %v680 = vunpack.c.h.b16 %v182
    %v681 = vunpack.c.l.b16 %v183
    %v682 = vunpack.c.h.b16 %v183
    %v683 = vunpack.c.l.b16 %v184
    %v684 = vunpack.c.h.b16 %v184
    %v685 = vunpack.c.l.b16 %v185
    %v686 = vunpack.c.h.b16 %v185
    %v687 = vunpack.c.l.b16 %v186
    %v688 = vunpack.c.h.b16 %v186
    %v689 = vunpack.c.l.b16 %v187
    %v690 = vunpack.c.h.b16 %v187
    %v691 = vunpack.c.l.b16 %v188
    %v692 = vunpack.c.h.b16 %v188
    %v693 = vunpack.c.l.b16 %v189
    %v694 = vunpack.c.h.b16 %v189
    %v695 = vunpack.c.l.b16 %v190
    %v696 = vunpack.c.h.b16 %v190
    %v697 = vunpack.c.l.b16 %v191
    %v698 = vunpack.c.h.b16 %v191
    %v699 = vunpack.c.l.b16 %v192
    %v700 = vunpack.c.h.b16 %v192
    %v701 = vunpack.c.l.b16 %v193
    %v702 = vunpack.c.h.b16 %v193
    %v703 = vunpack.c.l.b16 %v194
    %v704 = vunpack.c.h.b16 %v194
    %v705 = vunpack.c.l.b16 %v195
    %v706 = vunpack.c.h.b16 %v195
    %v707 = vunpack.c.l.b16 %v196
    %v708 = vunpack.c.h.b16 %v196
    %v709 = vunpack.c.l.b16 %v197
    %v710 = vunpack.c.h.b16 %v197
    %v711 = vunpack.c.l.b16 %v198
    %v712 = vunpack.c.h.b16 %v198
    %v713 = vunpack.c.l.b16 %v199
    %v714 = vunpack.c.h.b16 %v199
    %v715 = vunpack.c.l.b16 %v200
    %v716 = vunpack.c.h.b16 %v200
    %v717 = vunpack.c.l.b16 %v201
    %v718 = vunpack.c.h.b16 %v201
    %v719 = vunpack.c.l.b16 %v202
    %v720 = vunpack.c.h.b16 %v202
    %v721 = vunpack.c.l.b16 %v203
    %v722 = vunpack.c.h.b16 %v203
    %v723 = vunpack.c.l.b16 %v204
    %v724 = vunpack.c.h.b16 %v204
    %v725 = vunpack.c.l.b16 %v205
    %v726 = vunpack.c.h.b16 %v205
    %v727 = vunpack.c.l.b16 %v206
    %v728 = vunpack.c.h.b16 %v206
    %v729 = vunpack.c.l.b16 %v207
    %v730 = vunpack.c.h.b16 %v207
    %v731 = vunpack.c.l.b16 %v208
    %v732 = vunpack.c.h.b16 %v208
    %v733 = vunpack.c.l.b16 %v209
    %v734 = vunpack.c.h.b16 %v209
    %v735 = vunpack.c.l.b16 %v210
    %v736 = vunpack.c.h.b16 %v210
    %v737 = vunpack.c.l.b16 %v211
    %v738 = vunpack.c.h.b16 %v211
    %v739 = vunpack.c.l.b16 %v212
    %v740 = vunpack.c.h.b16 %v212
    %v741 = vunpack.c.l.b16 %v213
    %v742 = vunpack.c.h.b16 %v213
    %v743 = vunpack.c.l.b16 %v214
    %v744 = vunpack.c.h.b16 %v214
    %v745 = vunpack.c.l.b16 %v215
    %v746 = vunpack.c.h.b16 %v215
    %v747 = vunpack.c.l.b16 %v216
    %v748 = vunpack.c.h.b16 %v216
    %v749 = vunpack.c.l.b16 %v217
    %v750 = vunpack.c.h.b16 %v217
    %v751 = vunpack.c.l.b16 %v218
    %v752 = vunpack.c.h.b16 %v218
    %v753 = vunpack.c.l.b16 %v219
    %v754 = vunpack.c.h.b16 %v219
    %v755 = vunpack.c.l.b16 %v220
    %v756 = vunpack.c.h.b16 %v220
    %v757 = vunpack.c.l.b16 %v221
    %v758 = vunpack.c.h.b16 %v221
    %v759 = vunpack.c.l.b16 %v222
    %v760 = vunpack.c.h.b16 %v222
    %v761 = vunpack.c.l.b16 %v223
    %v762 = vunpack.c.h.b16 %v223
    %v763 = vunpack.c.l.b16 %v224
    %v764 = vunpack.c.h.b16 %v224
    %v765 = vunpack.c.l.b16 %v225
    %v766 = vunpack.c.h.b16 %v225
    %v767 = vunpack.c.l.b16 %v226
    %v768 = vunpack.c.h.b16 %v226
    %v769 = vunpack.c.l.b16 %v227
    %v770 = vunpack.c.h.b16 %v227
    %v771 = vunpack.c.l.b16 %v228
    %v772 = vunpack.c.h.b16 %v228
    %v773 = vunpack.c.l.b16 %v229
    %v774 = vunpack.c.h.b16 %v229
    %v775 = vunpack.c.l.b16 %v230
    %v776 = vunpack.c.h.b16 %v230
    %v777 = vunpack.c.l.b16 %v231
    %v778 = vunpack.c.h.b16 %v231
    %v779 = vunpack.c.l.b16 %v232
    %v780 = vunpack.c.h.b16 %v232
    %v781 = vunpack.c.l.b16 %v233
    %v782 = vunpack.c.h.b16 %v233
    %v783 = vunpack.c.l.b16 %v234
    %v784 = vunpack.c.h.b16 %v234
    %v785 = vunpack.c.l.b16 %v235
    %v786 = vunpack.c.h.b16 %v235
    %v787 = vunpack.c.l.b16 %v236
    %v788 = vunpack.c.h.b16 %v236
    %v789 = vunpack.c.l.b16 %v237
    %v790 = vunpack.c.h.b16 %v237
    %v791 = vunpack.c.l.b16 %v238
    %v792 = vunpack.c.h.b16 %v238
    %v793 = vunpack.c.l.b16 %v239
    %v794 = vunpack.c.h.b16 %v239
    %v795 = vunpack.c.l.b16 %v240
    %v796 = vunpack.c.h.b16 %v240
    %v797 = vunpack.c.l.b16 %v241
    %v798 = vunpack.c.h.b16 %v241
    %v799 = vunpack.c.l.b16 %v242
    %v800 = vunpack.c.h.b16 %v242
    %v801 = vunpack.c.l.b16 %v243
    %v802 = vunpack.c.h.b16 %v243
    %v803 = vunpack.c.l.b16 %v244
    %v804 = vunpack.c.h.b16 %v244
    %v805 = vunpack.c.l.b16 %v245
    %v806 = vunpack.c.h.b16 %v245
    %v807 = vunpack.c.l.b16 %v246
    %v808 = vunpack.c.h.b16 %v246
    %v809 = vunpack.c.l.b16 %v247
    %v810 = vunpack.c.h.b16 %v247
    %v811 = vunpack.c.l.b16 %v248
    %v812 = vunpack.c.h.b16 %v248
    %v813 = vunpack.c.l.b16 %v249
    %v814 = vunpack.c.h.b16 %v249
    %v815 = vunpack.c.l.b16 %v250
    %v816 = vunpack.c.h.b16 %v250
    %v817 = vunpack.c.l.b16 %v251
    %v818 = vunpack.c.h.b16 %v251
    %v819 = vunpack.c.l.b16 %v252
    %v820 = vunpack.c.h.b16 %v252
    %v821 = vunpack.c.l.b16 %v253
    %v822 = vunpack.c.h.b16 %v253
    %v823 = vunpack.c.l.b16 %v254
    %v824 = vunpack.c.h.b16 %v254
    %v825 = vunpack.c.l.b16 %v255
    %v826 = vunpack.c.h.b16 %v255
    %v827 = vunpack.c.l.b16 %v256
    %v828 = vunpack.c.h.b16 %v256
    %v829 = vunpack.c.l.b16 %v257
    %v830 = vunpack.c.h.b16 %v257
    %v831 = vunpack.c.l.b16 %v258
    %v832 = vunpack.c.h.b16 %v258
    %v833 = vunpack.c.l.b16 %v259
    %v834 = vunpack.c.h.b16 %v259
    %v835 = vunpack.c.l.b16 %v260
    %v836 = vunpack.c.h.b16 %v260
    %v837 = vpack.c.b16 %v457, %v453
    %v838 = vpack.c.b16 %v458, %v454
    %v839 = vpack.c.b16 %v459, %v455
    %v840 = vpack.c.b16 %v460, %v456
    %v841 = vpack.c.b16 %v465, %v461
    %v842 = vpack.c.b16 %v466, %v462
    %v843 = vpack.c.b16 %v467, %v463
    %v844 = vpack.c.b16 %v468, %v464
    %v845 = vpack.c.b16 %v473, %v469
    %v846 = vpack.c.b16 %v474, %v470
    %v847 = vpack.c.b16 %v475, %v471
    %v848 = vpack.c.b16 %v476, %v472
    %v849 = vpack.c.b16 %v481, %v477
    %v850 = vpack.c.b16 %v482, %v478
    %v851 = vpack.c.b16 %v483, %v479
    %v852 = vpack.c.b16 %v484, %v480
    %v853 = vpack.c.b16 %v489, %v485
    %v854 = vpack.c.b16 %v490, %v486
    %v855 = vpack.c.b16 %v491, %v487
    %v856 = vpack.c.b16 %v492, %v488
    %v857 = vpack.c.b16 %v497, %v493
    %v858 = vpack.c.b16 %v498, %v494
    %v859 = vpack.c.b16 %v499, %v495
    %v860 = vpack.c.b16 %v500, %v496
    %v861 = vpack.c.b16 %v505, %v501
    %v862 = vpack.c.b16 %v506, %v502
    %v863 = vpack.c.b16 %v507, %v503
    %v864 = vpack.c.b16 %v508, %v504
    %v865 = vpack.c.b16 %v513, %v509
    %v866 = vpack.c.b16 %v514, %v510
    %v867 = vpack.c.b16 %v515, %v511
    %v868 = vpack.c.b16 %v516, %v512
    %v869 = vpack.c.b16 %v521, %v517
    %v870 = vpack.c.b16 %v522, %v518
    %v871 = vpack.c.b16 %v523, %v519
    %v872 = vpack.c.b16 %v524, %v520
    %v873 = vpack.c.b16 %v529, %v525
    %v874 = vpack.c.b16 %v530, %v526
    %v875 = vpack.c.b16 %v531, %v527
    %v876 = vpack.c.b16 %v532, %v528
    %v877 = vpack.c.b16 %v537, %v533
    %v878 = vpack.c.b16 %v538, %v534
    %v879 = vpack.c.b16 %v539, %v535
    %v880 = vpack.c.b16 %v540, %v536
    %v881 = vpack.c.b16 %v545, %v541
    %v882 = vpack.c.b16 %v546, %v542
    %v883 = vpack.c.b16 %v547, %v543
    %v884 = vpack.c.b16 %v548, %v544
    %v885 = vpack.c.b16 %v553, %v549
    %v886 = vpack.c.b16 %v554, %v550
    %v887 = vpack.c.b16 %v555, %v551
    %v888 = vpack.c.b16 %v556, %v552
    %v889 = vpack.c.b16 %v561, %v557
    %v890 = vpack.c.b16 %v562, %v558
    %v891 = vpack.c.b16 %v563, %v559
    %v892 = vpack.c.b16 %v564, %v560
    %v893 = vpack.c.b16 %v569, %v565
    %v894 = vpack.c.b16 %v570, %v566
    %v895 = vpack.c.b16 %v571, %v567
    %v896 = vpack.c.b16 %v572, %v568
    %v897 = vpack.c.b16 %v577, %v573
    %v898 = vpack.c.b16 %v578, %v574
    %v899 = vpack.c.b16 %v579, %v575
    %v900 = vpack.c.b16 %v580, %v576
    %v901 = vpack.c.b16 %v585, %v581
    %v902 = vpack.c.b16 %v586, %v582
    %v903 = vpack.c.b16 %v587, %v583
    %v904 = vpack.c.b16 %v588, %v584
    %v905 = vpack.c.b16 %v593, %v589
    %v906 = vpack.c.b16 %v594, %v590
    %v907 = vpack.c.b16 %v595, %v591
    %v908 = vpack.c.b16 %v596, %v592
    %v909 = vpack.c.b16 %v601, %v597
    %v910 = vpack.c.b16 %v602, %v598
    %v911 = vpack.c.b16 %v603, %v599
    %v912 = vpack.c.b16 %v604, %v600
    %v913 = vpack.c.b16 %v609, %v605
    %v914 = vpack.c.b16 %v610, %v606
    %v915 = vpack.c.b16 %v611, %v607
    %v916 = vpack.c.b16 %v612, %v608
    %v917 = vpack.c.b16 %v617, %v613
    %v918 = vpack.c.b16 %v618, %v614
    %v919 = vpack.c.b16 %v619, %v615
    %v920 = vpack.c.b16 %v620, %v616
    %v921 = vpack.c.b16 %v625, %v621
    %v922 = vpack.c.b16 %v626, %v622
    %v923 = vpack.c.b16 %v627, %v623
    %v924 = vpack.c.b16 %v628, %v624
    %v925 = vpack.c.b16 %v633, %v629
    %v926 = vpack.c.b16 %v634, %v630
    %v927 = vpack.c.b16 %v635, %v631
    %v928 = vpack.c.b16 %v636, %v632
    %v929 = vpack.c.b16 %v641, %v637
    %v930 = vpack.c.b16 %v642, %v638
    %v931 = vpack.c.b16 %v643, %v639
    %v932 = vpack.c.b16 %v644, %v640
    %v933 = vpack.c.b16 %v649, %v645
    %v934 = vpack.c.b16 %v650, %v646
    %v935 = vpack.c.b16 %v651, %v647
    %v936 = vpack.c.b16 %v652, %v648
    %v937 = vpack.c.b16 %v657, %v653
    %v938 = vpack.c.b16 %v658, %v654
    %v939 = vpack.c.b16 %v659, %v655
    %v940 = vpack.c.b16 %v660, %v656
    %v941 = vpack.c.b16 %v665, %v661
    %v942 = vpack.c.b16 %v666, %v662
    %v943 = vpack.c.b16 %v667, %v663
    %v944 = vpack.c.b16 %v668, %v664
    %v945 = vpack.c.b16 %v673, %v669
    %v946 = vpack.c.b16 %v674, %v670
    %v947 = vpack.c.b16 %v675, %v671
    %v948 = vpack.c.b16 %v676, %v672
    %v949 = vpack.c.b16 %v681, %v677
    %v950 = vpack.c.b16 %v682, %v678
    %v951 = vpack.c.b16 %v683, %v679
    %v952 = vpack.c.b16 %v684, %v680
    %v953 = vpack.c.b16 %v689, %v685
    %v954 = vpack.c.b16 %v690, %v686
    %v955 = vpack.c.b16 %v691, %v687
    %v956 = vpack.c.b16 %v692, %v688
    %v957 = vpack.c.b16 %v697, %v693
    %v958 = vpack.c.b16 %v698, %v694
    %v959 = vpack.c.b16 %v699, %v695
    %v960 = vpack.c.b16 %v700, %v696
    %v961 = vpack.c.b16 %v705, %v701
    %v962 = vpack.c.b16 %v706, %v702
    %v963 = vpack.c.b16 %v707, %v703
    %v964 = vpack.c.b16 %v708, %v704
    %v965 = vpack.c.b16 %v713, %v709
    %v966 = vpack.c.b16 %v714, %v710
    %v967 = vpack.c.b16 %v715, %v711
    %v968 = vpack.c.b16 %v716, %v712
    %v969 = vpack.c.b16 %v721, %v717
    %v970 = vpack.c.b16 %v722, %v718
    %v971 = vpack.c.b16 %v723, %v719
    %v972 = vpack.c.b16 %v724, %v720
    %v973 = vpack.c.b16 %v729, %v725
    %v974 = vpack.c.b16 %v730, %v726
    %v975 = vpack.c.b16 %v731, %v727
    %v976 = vpack.c.b16 %v732, %v728
    %v977 = vpack.c.b16 %v737, %v733
    %v978 = vpack.c.b16 %v738, %v734
    %v979 = vpack.c.b16 %v739, %v735
    %v980 = vpack.c.b16 %v740, %v736
    %v981 = vpack.c.b16 %v745, %v741
    %v982 = vpack.c.b16 %v746, %v742
    %v983 = vpack.c.b16 %v747, %v743
    %v984 = vpack.c.b16 %v748, %v744
    %v985 = vpack.c.b16 %v753, %v749
    %v986 = vpack.c.b16 %v754, %v750
    %v987 = vpack.c.b16 %v755, %v751
    %v988 = vpack.c.b16 %v756, %v752
    %v989 = vpack.c.b16 %v761, %v757
    %v990 = vpack.c.b16 %v762, %v758
    %v991 = vpack.c.b16 %v763, %v759
    %v992 = vpack.c.b16 %v764, %v760
    %v993 = vpack.c.b16 %v769, %v765
    %v994 = vpack.c.b16 %v770, %v766
    %v995 = vpack.c.b16 %v771, %v767
    %v996 = vpack.c.b16 %v772, %v768
    %v997 = vpack.c.b16 %v777, %v773
    %v998 = vpack.c.b16 %v778, %v774
    %v999 = vpack.c.b16 %v779, %v775
    %v1000 = vpack.c.b16 %v780, %v776
    %v1001 = vpack.c.b16 %v785, %v781
    %v1002 = vpack.c.b16 %v786, %v782
    %v1003 = vpack.c.b16 %v787, %v783
    %v1004 = vpack.c.b16 %v788, %v784
    %v1005 = vpack.c.b16 %v793, %v789
    %v1006 = vpack.c.b16 %v794, %v790
    %v1007 = vpack.c.b16 %v795, %v791
    %v1008 = vpack.c.b16 %v796, %v792
    %v1009 = vpack.c.b16 %v801, %v797
    %v1010 = vpack.c.b16 %v802, %v798
    %v1011 = vpack.c.b16 %v803, %v799
    %v1012 = vpack.c.b16 %v804, %v800
    %v1013 = vpack.c.b16 %v809, %v805
    %v1014 = vpack.c.b16 %v810, %v806
    %v1015 = vpack.c.b16 %v811, %v807
    %v1016 = vpack.c.b16 %v812, %v808
    %v1017 = vpack.c.b16 %v817, %v813
    %v1018 = vpack.c.b16 %v818, %v814
    %v1019 = vpack.c.b16 %v819, %v815
    %v1020 = vpack.c.b16 %v820, %v816
    %v1021 = vpack.c.b16 %v825, %v821
    %v1022 = vpack.c.b16 %v826, %v822
    %v1023 = vpack.c.b16 %v827, %v823
    %v1024 = vpack.c.b16 %v828, %v824
    %v1025 = vpack.c.b16 %v833, %v829
    %v1026 = vpack.c.b16 %v834, %v830
    %v1027 = vpack.c.b16 %v835, %v831
    %v1028 = vpack.c.b16 %v836, %v832
    %1221 = vmatprep.subr.bf16.mxu0 %v838
    %1222 = vmatpush1.bf16.msra.mxu0 %v837
    %1223 = vmatprep.subr.bf16.mxu0 %v842
    %1224 = vmatpush1.bf16.msra.mxu0 %v841
    %1225 = vmatprep.subr.bf16.mxu0 %v846
    %1226 = vmatpush1.bf16.msra.mxu0 %v845
    %1227 = vmatprep.subr.bf16.mxu0 %v850
    %1228 = vmatpush1.bf16.msra.mxu0 %v849
    %1229 = vmatprep.subr.bf16.mxu0 %v854
    %1230 = vmatpush1.bf16.msra.mxu0 %v853
    %1231 = vmatprep.subr.bf16.mxu0 %v858
    %1232 = vmatpush1.bf16.msra.mxu0 %v857
    %1233 = vmatprep.subr.bf16.mxu0 %v862
    %1234 = vmatpush1.bf16.msra.mxu0 %v861
    %1235 = vmatprep.subr.bf16.mxu0 %v866
    %1236 = vmatpush1.bf16.msra.mxu0 %v865
    %1237 = vmatprep.subr.bf16.mxu0 %v870
    %1238 = vmatpush1.bf16.msra.mxu0 %v869
    %1239 = vmatprep.subr.bf16.mxu0 %v874
    %1240 = vmatpush1.bf16.msra.mxu0 %v873
    %1241 = vmatprep.subr.bf16.mxu0 %v878
    %1242 = vmatpush1.bf16.msra.mxu0 %v877
    %1243 = vmatprep.subr.bf16.mxu0 %v882
    %1244 = vmatpush1.bf16.msra.mxu0 %v881
    %1245 = vmatprep.subr.bf16.mxu0 %v886
    %1246 = vmatpush1.bf16.msra.mxu0 %v885
    %1247 = vmatprep.subr.bf16.mxu0 %v890
    %1248 = vmatpush1.bf16.msra.mxu0 %v889
    %1249 = vmatprep.subr.bf16.mxu0 %v894
    %1250 = vmatpush1.bf16.msra.mxu0 %v893
    %1251 = vmatprep.subr.bf16.mxu0 %v898
    %1252 = vmatpush1.bf16.msra.mxu0 %v897
    %1253 = vmatprep.mubr.bf16.mxu0 %v64
    %1254 = vmatmul.mubr.bf16.gmra.mrb[0].mxu0 %v63
    %v1255 = vpop.f32.mrb[0].mxu0
    %v1256 = vadd.f32 0.0, %v1255
    %v1257 = vpop.f32.mrb[0].mxu0
    %v1258 = vadd.f32 0.0, %v1257
    %v1259 = vpop.f32.mrb[0].mxu0
    %v1260 = vpop.f32.mrb[0].mxu0
    %1261 = vdwg.mxu0
    %1262 = vmatprep.subr.bf16.mxu0 %v902
    %1263 = vmatpush1.bf16.msra.mxu0 %v901
    %1264 = vmatprep.subr.bf16.mxu0 %v906
    %1265 = vmatpush1.bf16.msra.mxu0 %v905
    %1266 = vmatprep.subr.bf16.mxu0 %v910
    %1267 = vmatpush1.bf16.msra.mxu0 %v909
    %1268 = vmatprep.subr.bf16.mxu0 %v914
    %1269 = vmatpush1.bf16.msra.mxu0 %v913
    %1270 = vmatprep.subr.bf16.mxu0 %v918
    %1271 = vmatpush1.bf16.msra.mxu0 %v917
    %1272 = vmatprep.subr.bf16.mxu0 %v922
    %1273 = vmatpush1.bf16.msra.mxu0 %v921
    %1274 = vmatprep.subr.bf16.mxu0 %v926
    %1275 = vmatpush1.bf16.msra.mxu0 %v925
    %1276 = vmatprep.subr.bf16.mxu0 %v930
    %1277 = vmatpush1.bf16.msra.mxu0 %v929
    %1278 = vmatprep.subr.bf16.mxu0 %v934
    %1279 = vmatpush1.bf16.msra.mxu0 %v933
    %1280 = vmatprep.subr.bf16.mxu0 %v938
    %1281 = vmatpush1.bf16.msra.mxu0 %v937
    %1282 = vmatprep.subr.bf16.mxu0 %v942
    %1283 = vmatpush1.bf16.msra.mxu0 %v941
    %1284 = vmatprep.subr.bf16.mxu0 %v946
    %1285 = vmatpush1.bf16.msra.mxu0 %v945
    %1286 = vmatprep.subr.bf16.mxu0 %v950
    %1287 = vmatpush1.bf16.msra.mxu0 %v949
    %1288 = vmatprep.subr.bf16.mxu0 %v954
    %1289 = vmatpush1.bf16.msra.mxu0 %v953
    %1290 = vmatprep.subr.bf16.mxu0 %v958
    %1291 = vmatpush1.bf16.msra.mxu0 %v957
    %1292 = vmatprep.subr.bf16.mxu0 %v962
    %1293 = vmatpush1.bf16.msra.mxu0 %v961
    %1294 = vmatprep.mubr.bf16.mxu0 %v66
    %1295 = vmatmul.mubr.bf16.gmra.mrb[0].mxu0 %v65
    %v1296 = vpop.f32.mrb[0].mxu0
    %v1297 = vadd.f32 %v1256, %v1296
    %v1298 = vpop.f32.mrb[0].mxu0
    %v1299 = vadd.f32 %v1258, %v1298
    %v1300 = vpop.f32.mrb[0].mxu0
    %v1301 = vpop.f32.mrb[0].mxu0
    %1302 = vdwg.mxu0
    %1303 = vmatprep.subr.bf16.mxu0 %v966
    %1304 = vmatpush1.bf16.msra.mxu0 %v965
    %1305 = vmatprep.subr.bf16.mxu0 %v970
    %1306 = vmatpush1.bf16.msra.mxu0 %v969
    %1307 = vmatprep.subr.bf16.mxu0 %v974
    %1308 = vmatpush1.bf16.msra.mxu0 %v973
    %1309 = vmatprep.subr.bf16.mxu0 %v978
    %1310 = vmatpush1.bf16.msra.mxu0 %v977
    %1311 = vmatprep.subr.bf16.mxu0 %v982
    %1312 = vmatpush1.bf16.msra.mxu0 %v981
    %1313 = vmatprep.subr.bf16.mxu0 %v986
    %1314 = vmatpush1.bf16.msra.mxu0 %v985
    %1315 = vmatprep.subr.bf16.mxu0 %v990
    %1316 = vmatpush1.bf16.msra.mxu0 %v989
    %1317 = vmatprep.subr.bf16.mxu0 %v994
    %1318 = vmatpush1.bf16.msra.mxu0 %v993
    %1319 = vmatprep.subr.bf16.mxu0 %v998
    %1320 = vmatpush1.bf16.msra.mxu0 %v997
    %1321 = vmatprep.subr.bf16.mxu0 %v1002
    %1322 = vmatpush1.bf16.msra.mxu0 %v1001
    %1323 = vmatprep.subr.bf16.mxu0 %v1006
    %1324 = vmatpush1.bf16.msra.mxu0 %v1005
    %1325 = vmatprep.subr.bf16.mxu0 %v1010
    %1326 = vmatpush1.bf16.msra.mxu0 %v1009
    %1327 = vmatprep.subr.bf16.mxu0 %v1014
    %1328 = vmatpush1.bf16.msra.mxu0 %v1013
    %1329 = vmatprep.subr.bf16.mxu0 %v1018
    %1330 = vmatpush1.bf16.msra.mxu0 %v1017
    %1331 = vmatprep.subr.bf16.mxu0 %v1022
    %1332 = vmatpush1.bf16.msra.mxu0 %v1021
    %1333 = vmatprep.subr.bf16.mxu0 %v1026
    %1334 = vmatpush1.bf16.msra.mxu0 %v1025
    %1335 = vmatprep.mubr.bf16.mxu0 %v68
    %1336 = vmatmul.mubr.bf16.gmra.mrb[0].mxu0 %v67
    %v1337 = vpop.f32.mrb[0].mxu0
    %v1338 = vadd.f32 %v1297, %v1337
    %v1339 = vpop.f32.mrb[0].mxu0
    %v1340 = vadd.f32 %v1299, %v1339
    %v1341 = vpop.f32.mrb[0].mxu0
    %v1342 = vpop.f32.mrb[0].mxu0
    %1343 = vdwg.mxu0
    %1344 = vmatprep.subr.bf16.mxu0 %v840
    %1345 = vmatpush1.bf16.msra.mxu0 %v839
    %1346 = vmatprep.subr.bf16.mxu0 %v844
    %1347 = vmatpush1.bf16.msra.mxu0 %v843
    %1348 = vmatprep.subr.bf16.mxu0 %v848
    %1349 = vmatpush1.bf16.msra.mxu0 %v847
    %1350 = vmatprep.subr.bf16.mxu0 %v852
    %1351 = vmatpush1.bf16.msra.mxu0 %v851
    %1352 = vmatprep.subr.bf16.mxu0 %v856
    %1353 = vmatpush1.bf16.msra.mxu0 %v855
    %1354 = vmatprep.subr.bf16.mxu0 %v860
    %1355 = vmatpush1.bf16.msra.mxu0 %v859
    %1356 = vmatprep.subr.bf16.mxu0 %v864
    %1357 = vmatpush1.bf16.msra.mxu0 %v863
    %1358 = vmatprep.subr.bf16.mxu0 %v868
    %1359 = vmatpush1.bf16.msra.mxu0 %v867
    %1360 = vmatprep.subr.bf16.mxu0 %v872
    %1361 = vmatpush1.bf16.msra.mxu0 %v871
    %1362 = vmatprep.subr.bf16.mxu0 %v876
    %1363 = vmatpush1.bf16.msra.mxu0 %v875
    %1364 = vmatprep.subr.bf16.mxu0 %v880
    %1365 = vmatpush1.bf16.msra.mxu0 %v879
    %1366 = vmatprep.subr.bf16.mxu0 %v884
    %1367 = vmatpush1.bf16.msra.mxu0 %v883
    %1368 = vmatprep.subr.bf16.mxu0 %v888
    %1369 = vmatpush1.bf16.msra.mxu0 %v887
    %1370 = vmatprep.subr.bf16.mxu0 %v892
    %1371 = vmatpush1.bf16.msra.mxu0 %v891
    %1372 = vmatprep.subr.bf16.mxu0 %v896
    %1373 = vmatpush1.bf16.msra.mxu0 %v895
    %1374 = vmatprep.subr.bf16.mxu0 %v900
    %1375 = vmatpush1.bf16.msra.mxu0 %v899
    %1376 = vmatprep.mubr.bf16.mxu0 %v64
    %1377 = vmatmul.mubr.bf16.gmra.mrb[0].mxu0 %v63
    %v1378 = vpop.f32.mrb[0].mxu0
    %v1379 = vadd.f32 0.0, %v1378
    %v1380 = vpop.f32.mrb[0].mxu0
    %v1381 = vadd.f32 0.0, %v1380
    %v1382 = vpop.f32.mrb[0].mxu0
    %v1383 = vpop.f32.mrb[0].mxu0
    %1384 = vdwg.mxu0
    %1385 = vmatprep.subr.bf16.mxu0 %v904
    %1386 = vmatpush1.bf16.msra.mxu0 %v903
    %1387 = vmatprep.subr.bf16.mxu0 %v908
    %1388 = vmatpush1.bf16.msra.mxu0 %v907
    %1389 = vmatprep.subr.bf16.mxu0 %v912
    %1390 = vmatpush1.bf16.msra.mxu0 %v911
    %1391 = vmatprep.subr.bf16.mxu0 %v916
    %1392 = vmatpush1.bf16.msra.mxu0 %v915
    %1393 = vmatprep.subr.bf16.mxu0 %v920
    %1394 = vmatpush1.bf16.msra.mxu0 %v919
    %1395 = vmatprep.subr.bf16.mxu0 %v924
    %1396 = vmatpush1.bf16.msra.mxu0 %v923
    %1397 = vmatprep.subr.bf16.mxu0 %v928
    %1398 = vmatpush1.bf16.msra.mxu0 %v927
    %1399 = vmatprep.subr.bf16.mxu0 %v932
    %1400 = vmatpush1.bf16.msra.mxu0 %v931
    %1401 = vmatprep.subr.bf16.mxu0 %v936
    %1402 = vmatpush1.bf16.msra.mxu0 %v935
    %1403 = vmatprep.subr.bf16.mxu0 %v940
    %1404 = vmatpush1.bf16.msra.mxu0 %v939
    %1405 = vmatprep.subr.bf16.mxu0 %v944
    %1406 = vmatpush1.bf16.msra.mxu0 %v943
    %1407 = vmatprep.subr.bf16.mxu0 %v948
    %1408 = vmatpush1.bf16.msra.mxu0 %v947
    %1409 = vmatprep.subr.bf16.mxu0 %v952
    %1410 = vmatpush1.bf16.msra.mxu0 %v951
    %1411 = vmatprep.subr.bf16.mxu0 %v956
    %1412 = vmatpush1.bf16.msra.mxu0 %v955
    %1413 = vmatprep.subr.bf16.mxu0 %v960
    %1414 = vmatpush1.bf16.msra.mxu0 %v959
    %1415 = vmatprep.subr.bf16.mxu0 %v964
    %1416 = vmatpush1.bf16.msra.mxu0 %v963
    %1417 = vmatprep.mubr.bf16.mxu0 %v66
    %1418 = vmatmul.mubr.bf16.gmra.mrb[0].mxu0 %v65
    %v1419 = vpop.f32.mrb[0].mxu0
    %v1420 = vadd.f32 %v1379, %v1419
    %v1421 = vpop.f32.mrb[0].mxu0
    %v1422 = vadd.f32 %v1381, %v1421
    %v1423 = vpop.f32.mrb[0].mxu0
    %v1424 = vpop.f32.mrb[0].mxu0
    %1425 = vdwg.mxu0
    %1426 = vmatprep.subr.bf16.mxu0 %v968
    %1427 = vmatpush1.bf16.msra.mxu0 %v967
    %1428 = vmatprep.subr.bf16.mxu0 %v972
    %1429 = vmatpush1.bf16.msra.mxu0 %v971
    %1430 = vmatprep.subr.bf16.mxu0 %v976
    %1431 = vmatpush1.bf16.msra.mxu0 %v975
    %1432 = vmatprep.subr.bf16.mxu0 %v980
    %1433 = vmatpush1.bf16.msra.mxu0 %v979
    %1434 = vmatprep.subr.bf16.mxu0 %v984
    %1435 = vmatpush1.bf16.msra.mxu0 %v983
    %1436 = vmatprep.subr.bf16.mxu0 %v988
    %1437 = vmatpush1.bf16.msra.mxu0 %v987
    %1438 = vmatprep.subr.bf16.mxu0 %v992
    %1439 = vmatpush1.bf16.msra.mxu0 %v991
    %1440 = vmatprep.subr.bf16.mxu0 %v996
    %1441 = vmatpush1.bf16.msra.mxu0 %v995
    %1442 = vmatprep.subr.bf16.mxu0 %v1000
    %1443 = vmatpush1.bf16.msra.mxu0 %v999
    %1444 = vmatprep.subr.bf16.mxu0 %v1004
    %1445 = vmatpush1.bf16.msra.mxu0 %v1003
    %1446 = vmatprep.subr.bf16.mxu0 %v1008
    %1447 = vmatpush1.bf16.msra.mxu0 %v1007
    %1448 = vmatprep.subr.bf16.mxu0 %v1012
    %1449 = vmatpush1.bf16.msra.mxu0 %v1011
    %1450 = vmatprep.subr.bf16.mxu0 %v1016
    %1451 = vmatpush1.bf16.msra.mxu0 %v1015
    %1452 = vmatprep.subr.bf16.mxu0 %v1020
    %1453 = vmatpush1.bf16.msra.mxu0 %v1019
    %1454 = vmatprep.subr.bf16.mxu0 %v1024
    %1455 = vmatpush1.bf16.msra.mxu0 %v1023
    %1456 = vmatprep.subr.bf16.mxu0 %v1028
    %1457 = vmatpush1.bf16.msra.mxu0 %v1027
    %1458 = vmatprep.mubr.bf16.mxu0 %v68
    %1459 = vmatmul.mubr.bf16.gmra.mrb[0].mxu0 %v67
    %v1460 = vpop.f32.mrb[0].mxu0
    %v1461 = vadd.f32 %v1420, %v1460
    %v1462 = vpop.f32.mrb[0].mxu0
    %v1463 = vadd.f32 %v1422, %v1462
    %v1464 = vpop.f32.mrb[0].mxu0
    %v1465 = vpop.f32.mrb[0].mxu0
    %1466 = vdwg.mxu0
    %v1467 = vadd.f32 %v53, %v1338
    %v1468 = vadd.f32 %v54, %v1340
    %v1469 = vadd.f32 %v55, %v1461
    %v1470 = vadd.f32 %v56, %v1463
    %1471 = vst [vmem:[#allocation2] sm:$0xff] %v1467
    %1472 = vst [vmem:[#allocation2 + $0x8] sm:$0xff] %v1468
    %1473 = vst [vmem:[#allocation2 + $0x10] sm:$0xff] %v1469
    %1474 = vst [vmem:[#allocation2 + $0x18] sm:$0xff] %v1470
    // Predicated region
    $region30: #{tpu_custom_call.1} parent=1 // pred_check
      %p1475 = pneg %p45
    $region31: #{tpu_custom_call.1} parent=1 // pred_check_branch
      %1477 = sbr.rel (%p1475) target = $region33
    $region32: #{tpu_custom_call.1} parent=1 // pred_region
      %v1478 = vld [vmem:[#allocation2] sm:$0xff]
      %v1479 = vld [vmem:[#allocation2 + $0x8] sm:$0xff]
      %v1480 = vld [vmem:[#allocation2 + $0x10] sm:$0xff]
      %v1481 = vld [vmem:[#allocation2 + $0x18] sm:$0xff]
      %v1482 = vmul.f32 %v1478, %v1478
      %v1483 = vmul.f32 %v1479, %v1479
      %v1484 = vmul.f32 %v1480, %v1480
      %v1485 = vmul.f32 %v1481, %v1481
      %v1486 = vadd.f32 %v1482, %v1483
      %v1487 = vadd.f32 %v1486, %v1484
      %v1488 = vadd.f32 %v1487, %v1485
      %1489 = vadd.xlane.f32.xlu0 %v1488
      %v1490 = vpop.xlane.xlu0 %1489
      %v1491 = vmax.f32 %v1490, 1e-24
      %v1492 = vrsqrt.pop %v1491
      %v1493 = vld [vmem:[%s2] sm:$0xf]
      %v1495 = vlaneseq
      %v1496 = vshrl.u32 %v1495, 7
      %v1497 = vsub.s32 0, %v1496
      %v1498 = vrot.slane %v1493, %v1497
      %v1499 = vlaneseq
      %v1500 = vshrl.u32 %v1499, 7
      %v1501 = vsub.s32 1, %v1500
      %v1502 = vrot.slane %v1493, %v1501
      %v1503 = vlaneseq
      %v1504 = vshrl.u32 %v1503, 7
      %v1505 = vsub.s32 2, %v1504
      %v1506 = vrot.slane %v1493, %v1505
      %v1507 = vlaneseq
      %v1508 = vshrl.u32 %v1507, 7
      %v1509 = vsub.s32 3, %v1508
      %v1510 = vrot.slane %v1493, %v1509
      %v1515 = vmul.f32 %v1478, %v1498
      %v1516 = vmul.f32 %v1479, %v1502
      %v1517 = vmul.f32 %v1480, %v1506
      %v1518 = vmul.f32 %v1481, %v1510
      %v1519 = vadd.f32 %v1515, %v1516
      %v1520 = vadd.f32 %v1519, %v1517
      %v1521 = vadd.f32 %v1520, %v1518
      %1522 = vadd.xlane.f32.xlu0 %v1521
      %v1523 = vpop.xlane.xlu0 %1522
      %v1524 = vmul.f32 %v1523, %v1492
      %v1525 = vmul.f32 %v1524, 22.627417
      %s1526 = sld [smem:[#allocation3]]
      %v1527 = vstv %s1526
      %v1528 = vadd.f32 %v1525, %v1527
      %1529 = vst [vmem:[#allocation9] sm:$0xff] %v1528
    $region33: #{tpu_custom_call.1} parent=1 // pred_fallthru
      _
    // Predicated region
    $region34: #{tpu_custom_call.1} parent=1 // pred_check
      _
    $region35: #{tpu_custom_call.1} parent=1 // pred_check_branch
      %1531 = sbr.rel (0) target = $region37
    $region36: #{tpu_custom_call.1} parent=1 // pred_region
      %s1533 = ssub.s32 128, 128
      %1534 = vsyncadd [#allocation6], %s1533
      %s1536 = sshll.u32 [#allocation9], 4
      %s1537 = int_to_ptr.vmem [resolvable:$true] %s1536
      %1539 = dma.vmem_to_hbm [thread:$0]  %s1537, 128, %s4, [#allocation6]
    $region37: #{tpu_custom_call.1} parent=1 // pred_fallthru
      _
    // Predicated region
    $region38: #{tpu_custom_call.1} parent=1 // pred_check
      _
    $region39: #{tpu_custom_call.1} parent=1 // pred_check_branch
      %1541 = sbr.rel (0) target = $region41
    $region40: #{tpu_custom_call.1} parent=1 // pred_region
      %1542 = dma.done [#allocation6], 128
    $region41: #{tpu_custom_call.1} parent=1 // pred_fallthru
      _
    %1543 = vsyncpa [#allocation5], 1
    %1544 = vsyncpa [#allocation8], 1
    %1545 = vsyncpa [#allocation6], 1

</llo_original>
